<compile_context>
chip_gen: v7x
topology: tpu7x:2x2x1
jax: 0.10.0
libtpu: 0.0.40
codegen_flags: <defaults>
</compile_context>

<pallas_src>
import functools

import jax
import jax.numpy as jnp
import numpy as np
from jax.experimental import pallas as pl
from jax.experimental.pallas import tpu as pltpu


def _round_up(x, m):
    return ((x + m - 1) // m) * m


def _sublane_for_itemsize(itemsize):
    # Native sublane packing of the (8,128) f32 tile: bf16 -> 16 rows, i8 -> 32.
    return {4: 8, 2: 16, 1: 32}.get(int(itemsize), 8)


def _tpu_vmem_capacity_bytes():
    """Physical per-TensorCore VMEM; conservative fallback if query fails."""
    try:
        info = pltpu.get_tpu_info()
        cap = getattr(info, "vmem_capacity_bytes", None)
        if cap:
            return int(cap)
    except Exception:
        pass
    return 64 * 1024 * 1024  # v7x-sized fallback: safe on every generation


def _num_tensorcores():
    """TensorCores per chip (2 on v7x, 1 on v5e/v6e); conservative fallback 1."""
    try:
        info = pltpu.get_tpu_info()
        for name in ("num_cores", "tensorcore_count", "num_tensorcores",
                     "cores_per_chip"):
            v = getattr(info, name, None)
            if v:
                return int(v)
    except Exception:
        pass
    try:
        kind = jax.devices()[0].device_kind.lower()
        if "v7" in kind:
            return 2
    except Exception:
        pass
    return 1


def _vmem_budget_and_limit():
    """(tile budget for sizing, vmem_limit_bytes) derived from physical VMEM."""
    cap = _tpu_vmem_capacity_bytes()
    # Limit <= half of physical (<= 64 MiB); budget ~75% of the limit, leaving
    # headroom for internal/compiler scratch.  v7x (64 MiB): limit 32 MiB,
    # budget 24 MiB (~37% of physical).  v5e/v6e (128 MiB): limit/budget 64/48.
    limit = int(min(cap // 2, 64 * 1024 * 1024))
    budget = int(limit * 3 // 4)
    return budget, limit


def _choose_block_n(n, c, in_itemsize, sublane, vmem_budget_bytes, n_partials,
                    min_steps=4):
    """Largest sublane-aligned batch tile s.t. the double-buffered input tiles
    PLUS the f32 compute intermediates fit the budget, while keeping at least
    `min_steps` pipelined grid steps per partial (when N allows)."""
    # 2 inputs x 2 pipeline buffers of (block_n, C) at the input dtype, plus
    # ~4 live f32 (block_n, C) temporaries (s/log_p, e, q, kl elementwise).
    per_row = 2 * 2 * c * in_itemsize + 4 * c * 4 + 64
    bn = max(sublane, vmem_budget_bytes // per_row)

    # Guarantee several steps per partial so BlockSpec double-buffering has
    # something to overlap (DMA prologue/epilogue otherwise fully exposed).
    rows_per_partial = max(sublane, (n + n_partials - 1) // n_partials)
    bn = min(bn, max(sublane, rows_per_partial // min_steps))

    bn = min(bn, _round_up(n, sublane))
    return int(max(sublane, (bn // sublane) * sublane))


def _kl_kernel(x_ref, t_ref, o_ref, acc_ref, *, temperature, n_rows, block_n,
               steps_per_partial, n_tiles, approx_teacher_log):
    c = pl.program_id(0)          # partial-sum / TensorCore index ("parallel")
    i = pl.program_id(1)          # batch-tile step within partial ("arbitrary")

    @pl.when(i == 0)
    def _():
        acc_ref[...] = jnp.zeros_like(acc_ref)

    tile_idx = c * steps_per_partial + i

    # Skip all compute on clamped spare tiles (tile_idx >= n_tiles); the
    # index_map already re-points their DMA at the last real tile.
    @pl.when(tile_idx < n_tiles)
    def _compute():
        inv_t = jnp.float32(1.0 / temperature)

        # Student: numerically stable log_softmax over the class (lane) axis.
        s = x_ref[...].astype(jnp.float32) * inv_t
        s = s - jnp.max(s, axis=1, keepdims=True)
        log_p = s - jnp.log(jnp.sum(jnp.exp(s), axis=1, keepdims=True))

        # Teacher: softmax + 1e-7.  One reciprocal per ROW (EUP), no per-elem div.
        t = t_ref[...].astype(jnp.float32) * inv_t
        t = t - jnp.max(t, axis=1, keepdims=True)
        e = jnp.exp(t)
        row_sum = jnp.sum(e, axis=1, keepdims=True)
        q = e * pl.reciprocal(row_sum) + jnp.float32(1e-7)

        if approx_teacher_log:
            # Analytic log-softmax: drops one EUP log per element (v7x fast
            # path); differs from exact PyTorch by O(eps/p) per element.
            log_q = t - jnp.log(row_sum)
        else:
            log_q = jnp.log(q)            # exact PyTorch parity (default)

        # Per-row KL contribution (lane reduce over classes) -> (block_n, 1).
        row_kl = jnp.sum(q * (log_q - log_p), axis=1, keepdims=True)

        # Only the tile that can contain padded rows pays for the row mask.
        # Keep the where-SELECT (not multiply-by-mask): garbage padded rows
        # may hold inf/NaN and must be discarded, not multiplied by zero.
        is_tail = (tile_idx + 1) * block_n > n_rows

        @pl.when(is_tail)
        def _():
            row_ids = tile_idx * block_n + jax.lax.broadcasted_iota(
                jnp.int32, (block_n, 1), 0)
            masked = jnp.where(row_ids < n_rows, row_kl, 0.0)
            acc_ref[...] += jnp.sum(masked, keepdims=True)

        @pl.when(jnp.logical_not(is_tail))
        def _():
            acc_ref[...] += jnp.sum(row_kl, keepdims=True)

    # Finalize this partial: T^2 / N ("batchmean") scaling, one write per partial.
    @pl.when(i == steps_per_partial - 1)
    def _():
        scale = jnp.float32(temperature * temperature / n_rows)
        o_ref[...] = (acc_ref[...] * scale).reshape(1, 1, 1)


def kl_loss_pallas(student, teacher, temperature=3.0, block_n=None,
                   num_partials=None, approx_teacher_log=False):
    """Pallas implementation of KL_Loss.forward for (N, C) logits."""
    N, C = student.shape
    assert teacher.shape == (N, C)

    in_itemsize = max(jnp.dtype(student.dtype).itemsize,
                      jnp.dtype(teacher.dtype).itemsize)
    sublane = max(_sublane_for_itemsize(jnp.dtype(student.dtype).itemsize),
                  _sublane_for_itemsize(jnp.dtype(teacher.dtype).itemsize))

    if num_partials is None:
        num_partials = _num_tensorcores()      # 2 on v7x, 1 on v5e/v6e

    budget, vmem_limit = _vmem_budget_and_limit()

    if block_n is None:
        block_n = _choose_block_n(N, C, in_itemsize, sublane, budget,
                                  max(1, int(num_partials)))
    block_n = int(min(block_n, _round_up(N, sublane)))
    block_n = int(max(sublane, (block_n // sublane) * sublane))

    n_tiles = int(pl.cdiv(N, block_n))
    n_partials = max(1, min(int(num_partials), n_tiles))
    steps = int(pl.cdiv(n_tiles, n_partials))

    def in_index_map(c, i):
        # Clamp spare trailing tiles (when n_tiles % n_partials != 0) onto the
        # last real tile; the kernel skips their compute entirely.
        return (jnp.minimum(c * steps + i, n_tiles - 1), 0)

    kernel = functools.partial(
        _kl_kernel,
        temperature=float(temperature),
        n_rows=N,
        block_n=block_n,
        steps_per_partial=steps,
        n_tiles=n_tiles,
        approx_teacher_log=bool(approx_teacher_log),
    )

    bytes_in = N * C * (jnp.dtype(student.dtype).itemsize
                        + jnp.dtype(teacher.dtype).itemsize)
    transc_per_elem = 2 if approx_teacher_log else 3
    cost = pl.CostEstimate(flops=10 * N * C,
                           transcendentals=transc_per_elem * N * C,
                           bytes_accessed=bytes_in + 4 * n_partials)

    partials = pl.pallas_call(
        kernel,
        out_shape=jax.ShapeDtypeStruct((n_partials, 1, 1), jnp.float32),
        grid_spec=pltpu.PrefetchScalarGridSpec(
            num_scalar_prefetch=0,
            grid=(n_partials, steps),
            in_specs=[
                pl.BlockSpec((block_n, C), in_index_map),
                pl.BlockSpec((block_n, C), in_index_map),
            ],
            # One resident (1,1,1) accumulator block per partial / TensorCore.
            out_specs=pl.BlockSpec((1, 1, 1), lambda c, i: (c, 0, 0)),
            # Lane-dense (1,1) scalar accumulator; per-step full row reduce.
            scratch_shapes=[pltpu.VMEM((1, 1), jnp.float32)],
        ),
        compiler_params=pltpu.CompilerParams(
            dimension_semantics=("parallel", "arbitrary"),
            vmem_limit_bytes=vmem_limit,
        ),
        cost_estimate=cost,
    )(student, teacher)

    # Sum the per-TensorCore partials (each already scaled by T^2 / N).
    return jnp.sum(partials)


def kl_loss_ref(student, teacher, temperature=3.0, approx_teacher_log=False):
    """Pure-JAX reference (exact PyTorch formula) for validation."""
    T = temperature
    log_p = jax.nn.log_softmax(student.astype(jnp.float32) / T, axis=1)
    q = jax.nn.softmax(teacher.astype(jnp.float32) / T, axis=1) + 1e-7
    if approx_teacher_log:
        log_q = jax.nn.log_softmax(teacher.astype(jnp.float32) / T, axis=1)
    else:
        log_q = jnp.log(q)
    return T * T * jnp.sum(q * (log_q - log_p)) / student.shape[0]


if __name__ == "__main__":
    key = jax.random.PRNGKey(0)
    k1, k2, k3, k4, k5, k6 = jax.random.split(key, 6)

    # Case 1: lane-dense class dim (C multiple of 128), auto-sized batch tile,
    # hardware-derived num_partials / VMEM budget.
    N1, C1 = 64, 128
    s1 = jax.random.normal(k1, (N1, C1), dtype=jnp.float32) * 2.0
    t1 = jax.random.normal(k2, (N1, C1), dtype=jnp.float32) * 2.0
    loss1 = jax.block_until_ready(kl_loss_pallas(s1, t1, temperature=3.0))
    ref1 = jax.block_until_ready(kl_loss_ref(s1, t1, temperature=3.0))
    assert np.allclose(np.asarray(loss1), np.asarray(ref1),
                       rtol=2e-5, atol=1e-6), (float(loss1), float(ref1))

    # Case 2: ragged batch + tiny tile, exercising cdiv tail masking, the
    # 2-partial "parallel" split, and compute-skipped clamped spare tiles.
    N2, C2 = 50, 96
    s2 = jax.random.normal(k3, (N2, C2), dtype=jnp.float32) * 2.0
    t2 = jax.random.normal(k4, (N2, C2), dtype=jnp.float32) * 2.0
    loss2 = jax.block_until_ready(
        kl_loss_pallas(s2, t2, temperature=3.0, block_n=8, num_partials=2))
    ref2 = jax.block_until_ready(kl_loss_ref(s2, t2, temperature=3.0))
    assert np.allclose(np.asarray(loss2), np.asarray(ref2),
                       rtol=2e-5, atol=1e-6), (float(loss2), float(ref2))

    # Case 3: bf16 logits (halves HBM traffic on mem-bound v5e/v6e) with the
    # 16-row native sublane alignment, plus the analytic teacher-log fast
    # path (validated against the matching analytic JAX reference).
    N3, C3 = 48, 256
    s3 = (jax.random.normal(k5, (N3, C3), dtype=jnp.float32) * 2.0
          ).astype(jnp.bfloat16)
    t3 = (jax.random.normal(k6, (N3, C3), dtype=jnp.float32) * 2.0
          ).astype(jnp.bfloat16)
    loss3 = jax.block_until_ready(
        kl_loss_pallas(s3, t3, temperature=3.0, approx_teacher_log=True))
    ref3 = jax.block_until_ready(
        kl_loss_ref(s3, t3, temperature=3.0, approx_teacher_log=True))
    assert np.allclose(np.asarray(loss3), np.asarray(ref3),
                       rtol=2e-5, atol=1e-6), (float(loss3), float(ref3))

    print("KERNEL_OK")
</pallas_src>

<mosaic_0001>
module attributes {stable_mosaic.version = 11 : i64} {
  func.func @_kl_kernel(%arg0: i32, %arg1: i32, %arg2: memref<16x128xf32, #tpu.memory_space<vmem>>, %arg3: memref<16x128xf32, #tpu.memory_space<vmem>>, %arg4: memref<1x1x1xf32, #tpu.memory_space<vmem>>, %arg5: memref<1x1xf32, #tpu.memory_space<vmem>>) attributes {dimension_semantics = [#tpu.dimension_semantics<parallel>, #tpu.dimension_semantics<arbitrary>], iteration_bounds = array<i64: 1, 4>, scalar_prefetch = 0 : i64, scratch_operands = 1 : i64, tpu.core_type = #tpu.core_type<tc>, window_params = [{transform_indices = @transform_0, window_bounds = array<i64: 16, 128>}, {transform_indices = @transform_1, window_bounds = array<i64: 16, 128>}, {transform_indices = @transform_2, window_bounds = array<i64: 1, 1, 1>}]} {
    %c0_i32 = arith.constant 0 : i32
    %0 = arith.cmpi eq, %arg1, %c0_i32 : i32
    %1 = arith.extui %0 : i1 to i32
    %c0_i32_0 = arith.constant 0 : i32
    %2 = arith.cmpi ne, %1, %c0_i32_0 : i32
    scf.if %2 {
      %cst = arith.constant 0.000000e+00 : f32
      %11 = vector.broadcast %cst : f32 to vector<1x1xf32>
      %c0 = arith.constant 0 : index
      %c0_4 = arith.constant 0 : index
      %12 = vector.load %arg5[%c0, %c0_4] : memref<1x1xf32, #tpu.memory_space<vmem>>, vector<1x1xf32>
      tpu.vector_store %arg5[%c0, %c0_4], %11 {strides = array<i32>} : memref<1x1xf32, #tpu.memory_space<vmem>>, vector<1x1xf32>,
    } else {
    }
    %c4_i32 = arith.constant 4 : i32
    %3 = arith.muli %arg0, %c4_i32 : i32
    %4 = arith.addi %3, %arg1 : i32
    %c4_i32_1 = arith.constant 4 : i32
    %5 = arith.cmpi slt, %4, %c4_i32_1 : i32
    %6 = arith.extui %5 : i1 to i32
    %c0_i32_2 = arith.constant 0 : i32
    %7 = arith.cmpi ne, %6, %c0_i32_2 : i32
    scf.if %7 {
      %c0 = arith.constant 0 : index
      %c0_4 = arith.constant 0 : index
      %11 = vector.load %arg2[%c0, %c0_4] : memref<16x128xf32, #tpu.memory_space<vmem>>, vector<16x128xf32>
      %cst = arith.constant 0.333333343 : f32
      %12 = vector.broadcast %cst : f32 to vector<16x128xf32>
      %13 = arith.mulf %11, %12 : vector<16x128xf32>
      %cst_5 = arith.constant dense<0xFF800000> : vector<16xf32>
      %14 = vector.multi_reduction <maximumf>, %13, %cst_5 [1] : vector<16x128xf32> to vector<16xf32>
      %15 = vector.shape_cast %14 : vector<16xf32> to vector<16x1xf32>
      %16 = vector.broadcast %15 : vector<16x1xf32> to vector<16x128xf32>
      %17 = arith.subf %13, %16 : vector<16x128xf32>
      %18 = math.exp %17 : vector<16x128xf32>
      %cst_6 = arith.constant dense<0.000000e+00> : vector<16xf32>
      %19 = vector.multi_reduction <add>, %18, %cst_6 [1] : vector<16x128xf32> to vector<16xf32>
      %20 = vector.shape_cast %19 : vector<16xf32> to vector<16x1xf32>
      %21 = math.log %20 : vector<16x1xf32>
      %22 = vector.broadcast %21 : vector<16x1xf32> to vector<16x128xf32>
      %23 = arith.subf %17, %22 : vector<16x128xf32>
      %c0_7 = arith.constant 0 : index
      %c0_8 = arith.constant 0 : index
      %24 = vector.load %arg3[%c0_7, %c0_8] : memref<16x128xf32, #tpu.memory_space<vmem>>, vector<16x128xf32>
      %cst_9 = arith.constant 0.333333343 : f32
      %25 = vector.broadcast %cst_9 : f32 to vector<16x128xf32>
      %26 = arith.mulf %24, %25 : vector<16x128xf32>
      %cst_10 = arith.constant dense<0xFF800000> : vector<16xf32>
      %27 = vector.multi_reduction <maximumf>, %26, %cst_10 [1] : vector<16x128xf32> to vector<16xf32>
      %28 = vector.shape_cast %27 : vector<16xf32> to vector<16x1xf32>
      %29 = vector.broadcast %28 : vector<16x1xf32> to vector<16x128xf32>
      %30 = arith.subf %26, %29 : vector<16x128xf32>
      %31 = math.exp %30 : vector<16x128xf32>
      %cst_11 = arith.constant dense<0.000000e+00> : vector<16xf32>
      %32 = vector.multi_reduction <add>, %31, %cst_11 [1] : vector<16x128xf32> to vector<16xf32>
      %33 = vector.shape_cast %32 : vector<16xf32> to vector<16x1xf32>
      %34 = tpu.reciprocal %33 : vector<16x1xf32> -> vector<16x1xf32>
      %35 = vector.broadcast %34 : vector<16x1xf32> to vector<16x128xf32>
      %36 = arith.mulf %31, %35 : vector<16x128xf32>
      %cst_12 = arith.constant 1.000000e-07 : f32
      %37 = vector.broadcast %cst_12 : f32 to vector<16x128xf32>
      %38 = arith.addf %36, %37 : vector<16x128xf32>
      %39 = math.log %38 : vector<16x128xf32>
      %40 = arith.subf %39, %23 : vector<16x128xf32>
      %41 = arith.mulf %38, %40 : vector<16x128xf32>
      %cst_13 = arith.constant dense<0.000000e+00> : vector<16xf32>
      %42 = vector.multi_reduction <add>, %41, %cst_13 [1] : vector<16x128xf32> to vector<16xf32>
      %43 = vector.shape_cast %42 : vector<16xf32> to vector<16x1xf32>
      %c1_i32 = arith.constant 1 : i32
      %44 = arith.addi %4, %c1_i32 : i32
      %c16_i32 = arith.constant 16 : i32
      %45 = arith.muli %44, %c16_i32 : i32
      %c64_i32 = arith.constant 64 : i32
      %46 = arith.cmpi sgt, %45, %c64_i32 : i32
      %47 = arith.extui %46 : i1 to i32
      %c0_i32_14 = arith.constant 0 : i32
      %48 = arith.cmpi ne, %47, %c0_i32_14 : i32
      scf.if %48 {
        %c16_i32_16 = arith.constant 16 : i32
        %52 = arith.muli %4, %c16_i32_16 : i32
        %53 = tpu.iota {dimensions = array<i32: 0>} : vector<16x1xi32>
        %54 = vector.broadcast %52 : i32 to vector<16x1xi32>
        %55 = arith.addi %54, %53 : vector<16x1xi32>
        %c64_i32_17 = arith.constant 64 : i32
        %56 = vector.broadcast %c64_i32_17 : i32 to vector<16x1xi32>
        %57 = arith.cmpi slt, %55, %56 : vector<16x1xi32>
        %cst_18 = arith.constant 0.000000e+00 : f32
        %58 = vector.broadcast %cst_18 : f32 to vector<16x1xf32>
        %59 = arith.select %57, %43, %58 : vector<16x1xi1>, vector<16x1xf32>
        %c0_19 = arith.constant 0 : index
        %c0_20 = arith.constant 0 : index
        %60 = vector.load %arg5[%c0_19, %c0_20] : memref<1x1xf32, #tpu.memory_space<vmem>>, vector<1x1xf32>
        %61 = vector.shape_cast %59 : vector<16x1xf32> to vector<1x16x1xf32>
        %cst_21 = arith.constant dense<0.000000e+00> : vector<1xf32>
        %62 = vector.multi_reduction <add>, %61, %cst_21 [1, 2] : vector<1x16x1xf32> to vector<1xf32>
        %63 = vector.shape_cast %62 : vector<1xf32> to vector<1x1x1xf32>
        %64 = vector.extract %63[0, 0, 0] : f32 from vector<1x1x1xf32>
        %65 = vector.broadcast %64 : f32 to vector<1x1xf32>
        %66 = arith.addf %60, %65 : vector<1x1xf32>
        %c0_22 = arith.constant 0 : index
        %c0_23 = arith.constant 0 : index
        %67 = vector.load %arg5[%c0_22, %c0_23] : memref<1x1xf32, #tpu.memory_space<vmem>>, vector<1x1xf32>
        tpu.vector_store %arg5[%c0_22, %c0_23], %66 {strides = array<i32>} : memref<1x1xf32, #tpu.memory_space<vmem>>, vector<1x1xf32>,
      } else {
      }
      %true = arith.constant true
      %49 = arith.xori %46, %true : i1
      %50 = arith.extui %49 : i1 to i32
      %c0_i32_15 = arith.constant 0 : i32
      %51 = arith.cmpi ne, %50, %c0_i32_15 : i32
      scf.if %51 {
        %c0_16 = arith.constant 0 : index
        %c0_17 = arith.constant 0 : index
        %52 = vector.load %arg5[%c0_16, %c0_17] : memref<1x1xf32, #tpu.memory_space<vmem>>, vector<1x1xf32>
        %53 = vector.shape_cast %43 : vector<16x1xf32> to vector<1x16x1xf32>
        %cst_18 = arith.constant dense<0.000000e+00> : vector<1xf32>
        %54 = vector.multi_reduction <add>, %53, %cst_18 [1, 2] : vector<1x16x1xf32> to vector<1xf32>
        %55 = vector.shape_cast %54 : vector<1xf32> to vector<1x1x1xf32>
        %56 = vector.extract %55[0, 0, 0] : f32 from vector<1x1x1xf32>
        %57 = vector.broadcast %56 : f32 to vector<1x1xf32>
        %58 = arith.addf %52, %57 : vector<1x1xf32>
        %c0_19 = arith.constant 0 : index
        %c0_20 = arith.constant 0 : index
        %59 = vector.load %arg5[%c0_19, %c0_20] : memref<1x1xf32, #tpu.memory_space<vmem>>, vector<1x1xf32>
        tpu.vector_store %arg5[%c0_19, %c0_20], %58 {strides = array<i32>} : memref<1x1xf32, #tpu.memory_space<vmem>>, vector<1x1xf32>,
      } else {
      }
    } else {
    }
    %c3_i32 = arith.constant 3 : i32
    %8 = arith.cmpi eq, %arg1, %c3_i32 : i32
    %9 = arith.extui %8 : i1 to i32
    %c0_i32_3 = arith.constant 0 : i32
    %10 = arith.cmpi ne, %9, %c0_i32_3 : i32
    scf.if %10 {
      %c0 = arith.constant 0 : index
      %c0_4 = arith.constant 0 : index
      %11 = vector.load %arg5[%c0, %c0_4] : memref<1x1xf32, #tpu.memory_space<vmem>>, vector<1x1xf32>
      %cst = arith.constant 1.406250e-01 : f32
      %12 = vector.broadcast %cst : f32 to vector<1x1xf32>
      %13 = arith.mulf %11, %12 : vector<1x1xf32>
      %14 = vector.shape_cast %13 : vector<1x1xf32> to vector<1x1x1xf32>
      %c0_5 = arith.constant 0 : index
      %c0_6 = arith.constant 0 : index
      %c0_7 = arith.constant 0 : index
      %15 = vector.load %arg4[%c0_5, %c0_6, %c0_7] : memref<1x1x1xf32, #tpu.memory_space<vmem>>, vector<1x1x1xf32>
      tpu.vector_store %arg4[%c0_5, %c0_6, %c0_7], %14 {strides = array<i32>} : memref<1x1x1xf32, #tpu.memory_space<vmem>>, vector<1x1x1xf32>,
    } else {
    }
    return
  }
  func.func @transform_0(%arg0: i32, %arg1: i32) -> (i32, i32) {
    %c4_i32 = arith.constant 4 : i32
    %0 = arith.muli %arg0, %c4_i32 : i32
    %1 = arith.addi %0, %arg1 : i32
    %c3_i32 = arith.constant 3 : i32
    %2 = arith.minsi %1, %c3_i32 : i32
    %c0_i32 = arith.constant 0 : i32
    %c0_i32_0 = arith.constant 0 : i32
    return %2, %c0_i32 : i32, i32
  }
  func.func @transform_1(%arg0: i32, %arg1: i32) -> (i32, i32) {
    %c4_i32 = arith.constant 4 : i32
    %0 = arith.muli %arg0, %c4_i32 : i32
    %1 = arith.addi %0, %arg1 : i32
    %c3_i32 = arith.constant 3 : i32
    %2 = arith.minsi %1, %c3_i32 : i32
    %c0_i32 = arith.constant 0 : i32
    %c0_i32_0 = arith.constant 0 : i32
    return %2, %c0_i32 : i32, i32
  }
  func.func @transform_2(%arg0: i32, %arg1: i32) -> (i32, i32, i32) {
    %c0_i32 = arith.constant 0 : i32
    %c0_i32_0 = arith.constant 0 : i32
    %c0_i32_1 = arith.constant 0 : i32
    return %arg0, %c0_i32, %c0_i32_0 : i32, i32, i32
  }
}

</mosaic_0001>

<llo_original>
// kernel: tpu_custom_call.1
$region0: #{tpu_custom_call.1}
  #allocation0 [shape = 'u32[]', space=smem, size = 0x4, offset = 0x4, fixed_abs, tag = 'smem constant byte address 0x4 - core index']
  #allocation1 [shape = 'u32[144,128]{1,0:T(1,128)}', space=vmem, size = 0x12000, scoped, tag = 'internal scratch']
  #allocation2 [shape = 'f32[1,1]{1,0:T(1,128)}', space=vmem, size = 0x200, scoped, tag = 'scratch operand']
  %s0 = inlined_call_operand.hbm [shape: f32[64,128], index: 0, kind: input, shape index: {}]
  %s1 = inlined_call_operand.hbm [shape: f32[64,128], index: 1, kind: input, shape index: {}]
  %s2 = inlined_call_operand.hbm [shape: f32[1,1,1], index: 2, kind: output, shape index: {}]
  %s3 = sld [smem:[#allocation0]]
  $region69: #{tpu_custom_call.1} parent=0
    _
  %s5 = ssub.s32 1, %s3
  %s6 = scalar_select 0, %s5, %s3
  $region1: #{tpu_custom_call.1} parent=0
    #allocation3 [shape = 'u8[16384]{0}', space=vmem, size = 0x4000, scoped, tag = 'input window, operand 0']
    #allocation4 [shape = 's32[2]{0}', space=sflag, size = 0x8, scoped, tag = 'scoped memory for tpu_custom_call.1']
    #allocation5 [shape = 's32[2]{0}', space=sflag, size = 0x8, scoped, tag = 'scoped memory for tpu_custom_call.1']
    #allocation6 [shape = 'u8[16384]{0}', space=vmem, size = 0x4000, scoped, tag = 'input window, operand 1']
    #allocation7 [shape = 's32[2]{0}', space=sflag, size = 0x8, scoped, tag = 'scoped memory for tpu_custom_call.1']
    #allocation8 [shape = 'u8[512]{0}', space=vmem, size = 0x400, scoped, tag = 'output window, operand 0, single buffered']
    %7 = vsyncpa [#allocation4], 0
    %s8 = scalar_lea.sflag [#allocation4], 1
    %9 = vsyncpa %s8, 0
    %10 = vsyncpa [#allocation7], 0
    %s11 = scalar_lea.sflag [#allocation7], 1
    %12 = vsyncpa %s11, 0
    %13 = vsyncpa [#allocation5], 0
    loop: start=0, step=1, limit=6
    $region2: #{tpu_custom_call.1} parent=1 // loop_pre_header
      _
    $region3: #{tpu_custom_call.1} parent=1 // loop_header
      %s15 = sphi 0, %s19
      %p16 = scmp.ge.s32.totalorder %s15, 6
      %s22 = sphi 0, %s34
      %s23 = sphi 0, %s30
      %s24 = sphi 0, %s22
      %s25 = sphi 0, %s23
      %s26 = sphi 0, %s24
      %s27 = sphi 0, %s25
      %s45 = sphi 0, %s47
      %s48 = sphi 0, %s45
      %s49 = sphi 0, %s48
      %s65 = sphi 0, %s49
      %s79 = sphi 0, %s81
      %s82 = sphi 0, %s79
      %s83 = sphi 0, %s82
      %s99 = sphi 0, %s83
      %s105 = sphi 0, %s107
      %s108 = sphi 0, %s105
      %s109 = sphi 0, %s108
      %s125 = sphi 0, %s109
    $region4: #{tpu_custom_call.1} parent=1 // loop_header_branch
      %18 = sbr.rel (%p16) target = $region8
    $region5: #{tpu_custom_call.1} parent=1 // loop_body
      %s20 = ssub.s32 %s15, 1
      %s21 = ssub.s32 %s15, 2
      %s28 = sadd.s32 1, %s23
      %p29 = scmp.ge.s32.totalorder %s28, 4
      %s30 = scalar_select %p29, 0, %s28
      %s31 = sadd.s32 1, %s22
      %s32 = scalar_select %p29, %s31, %s22
      %p33 = scmp.ge.s32.totalorder %s32, 1
      %s34 = scalar_select %p33, 0, %s32
      %s35 = smul.u32 %s22, 4
      %s36 = sadd.s32 %s35, %s23
      %p37 = scmp.lt.s32.totalorder %s36, 3
      %s38 = scalar_select %p37, %s36, 3
      %s39 = smul.u32 %s34, 4
      %s40 = sadd.s32 %s39, %s30
      %p41 = scmp.lt.s32.totalorder %s40, 3
      %s42 = scalar_select %p41, %s40, 3
      %s43 = ssub.s32 %s38, %s42
      %p44 = scmp.eq.s32.totalorder %s43, 0
      %s46 = sadd.s32 %s45, 1
      %s47 = scalar_select %p44, %s45, %s46
      %p50 = pneg %p44
      %p51 = scmp.eq.s32.totalorder %s15, 3
      %p52 = por %p50, %p51
      %p53 = scmp.ne.s32.totalorder %s45, %s48
      %p54 = scmp.eq.s32.totalorder %s15, 0
      %p55 = por %p53, %p54
      %p56 = scmp.ne.s32.totalorder %s45, %s48
      %p57 = scmp.eq.s32.totalorder %s20, 3
      %p58 = por %p56, %p57
      %p59 = scmp.ne.s32.totalorder %s48, %s49
      %p60 = scmp.eq.s32.totalorder %s20, 0
      %p61 = por %p59, %p60
      %p62 = scmp.ne.s32.totalorder %s48, %s49
      %p63 = scmp.eq.s32.totalorder %s21, 3
      %p64 = por %p62, %p63
      %p66 = scmp.ne.s32.totalorder %s49, %s65
      %p67 = scmp.eq.s32.totalorder %s21, 0
      %p68 = por %p66, %p67
      %s69 = smul.u32 %s22, 4
      %s70 = sadd.s32 %s69, %s23
      %p71 = scmp.lt.s32.totalorder %s70, 3
      %s72 = scalar_select %p71, %s70, 3
      %s73 = smul.u32 %s34, 4
      %s74 = sadd.s32 %s73, %s30
      %p75 = scmp.lt.s32.totalorder %s74, 3
      %s76 = scalar_select %p75, %s74, 3
      %s77 = ssub.s32 %s72, %s76
      %p78 = scmp.eq.s32.totalorder %s77, 0
      %s80 = sadd.s32 %s79, 1
      %s81 = scalar_select %p78, %s79, %s80
      %p84 = pneg %p78
      %p85 = scmp.eq.s32.totalorder %s15, 3
      %p86 = por %p84, %p85
      %p87 = scmp.ne.s32.totalorder %s79, %s82
      %p88 = scmp.eq.s32.totalorder %s15, 0
      %p89 = por %p87, %p88
      %p90 = scmp.ne.s32.totalorder %s79, %s82
      %p91 = scmp.eq.s32.totalorder %s20, 3
      %p92 = por %p90, %p91
      %p93 = scmp.ne.s32.totalorder %s82, %s83
      %p94 = scmp.eq.s32.totalorder %s20, 0
      %p95 = por %p93, %p94
      %p96 = scmp.ne.s32.totalorder %s82, %s83
      %p97 = scmp.eq.s32.totalorder %s21, 3
      %p98 = por %p96, %p97
      %p100 = scmp.ne.s32.totalorder %s83, %s99
      %p101 = scmp.eq.s32.totalorder %s21, 0
      %p102 = por %p100, %p101
      %s103 = ssub.s32 %s22, %s34
      %p104 = scmp.eq.s32.totalorder %s103, 0
      %s106 = sadd.s32 %s105, 1
      %s107 = scalar_select %p104, %s105, %s106
      %p110 = pneg %p104
      %p111 = scmp.eq.s32.totalorder %s15, 3
      %p112 = por %p110, %p111
      %p113 = scmp.ne.s32.totalorder %s105, %s108
      %p114 = scmp.eq.s32.totalorder %s15, 0
      %p115 = por %p113, %p114
      %p116 = scmp.ne.s32.totalorder %s105, %s108
      %p117 = scmp.eq.s32.totalorder %s20, 3
      %p118 = por %p116, %p117
      %p119 = scmp.ne.s32.totalorder %s108, %s109
      %p120 = scmp.eq.s32.totalorder %s20, 0
      %p121 = por %p119, %p120
      %p122 = scmp.ne.s32.totalorder %s108, %s109
      %p123 = scmp.eq.s32.totalorder %s21, 3
      %p124 = por %p122, %p123
      %p126 = scmp.ne.s32.totalorder %s109, %s125
      %p127 = scmp.eq.s32.totalorder %s21, 0
      %p128 = por %p126, %p127
      %p129 = scmp.le.s32.totalorder 1, %s15
      %p130 = scmp.lt.s32.totalorder %s15, 5
      %p131 = pnand %p129, %p130
      %p132 = pneg %p131
      // Predicated region
      $region9: #{tpu_custom_call.1} parent=5 // pred_check
        _
      $region10: #{tpu_custom_call.1} parent=5 // pred_check_branch
        %134 = sbr.rel (%p131) target = $region12
      $region11: #{tpu_custom_call.1} parent=5 // pred_region
        %s135 = ssub.s32 %s15, 1
      $region12: #{tpu_custom_call.1} parent=5 // pred_fallthru
        _
      %p136 = scmp.lt.s32.totalorder %s15, 4
      // Predicated region
      $region13: #{tpu_custom_call.1} parent=5 // pred_check
        %p137 = pneg %p136
      $region14: #{tpu_custom_call.1} parent=5 // pred_check_branch
        %139 = sbr.rel (%p137) target = $region16
      $region15: #{tpu_custom_call.1} parent=5 // pred_region
        // Predicated region
        $region17: #{tpu_custom_call.1} parent=15 // pred_check
          %p140 = pneg %p55
        $region18: #{tpu_custom_call.1} parent=15 // pred_check_branch
          %142 = sbr.rel (%p140) target = $region20
        $region19: #{tpu_custom_call.1} parent=15 // pred_region
          %s143 = sand.u32 %s45, 1
          %s144 = scalar_lea.sflag [#allocation4], %s143
          %s145 = sand.u32 %s45, 1
          %s146 = smul.addr %s145, 16
          %s147 = scalar_lea.vmem [#allocation3], %s146
          %s148 = smul.u32 %s22, 4
          %s149 = sadd.s32 %s148, %s23
          %p150 = scmp.lt.s32.totalorder %s149, 3
          %s151 = scalar_select %p150, %s149, 3
          %s152 = smul.u32 2, %s151
          %s154 = ssub.s32 256, 256
          %155 = vsyncadd %s144, %s154
          %s156 = smul.addr %s152, 128
          %s157 = scalar_lea.hbm %s0, %s156
          %s158 = sshll.u32 %s147, 4
          %s159 = int_to_ptr.vmem [resolvable:$true] %s158
          %164 = dma.hbm_to_vmem [thread:$0]  %s157, 256, %s159, %s144, 128, 128, 8
        $region20: #{tpu_custom_call.1} parent=15 // pred_fallthru
          _
        // Predicated region
        $region21: #{tpu_custom_call.1} parent=15 // pred_check
          %p165 = pneg %p89
        $region22: #{tpu_custom_call.1} parent=15 // pred_check_branch
          %167 = sbr.rel (%p165) target = $region24
        $region23: #{tpu_custom_call.1} parent=15 // pred_region
          %s168 = sand.u32 %s79, 1
          %s169 = scalar_lea.sflag [#allocation7], %s168
          %s170 = sand.u32 %s79, 1
          %s171 = smul.addr %s170, 16
          %s172 = scalar_lea.vmem [#allocation6], %s171
          %s173 = smul.u32 %s22, 4
          %s174 = sadd.s32 %s173, %s23
          %p175 = scmp.lt.s32.totalorder %s174, 3
          %s176 = scalar_select %p175, %s174, 3
          %s177 = smul.u32 2, %s176
          %s179 = ssub.s32 256, 256
          %180 = vsyncadd %s169, %s179
          %s181 = smul.addr %s177, 128
          %s182 = scalar_lea.hbm %s1, %s181
          %s183 = sshll.u32 %s172, 4
          %s184 = int_to_ptr.vmem [resolvable:$true] %s183
          %189 = dma.hbm_to_vmem [thread:$0]  %s182, 256, %s184, %s169, 128, 128, 8
        $region24: #{tpu_custom_call.1} parent=15 // pred_fallthru
          _
      $region16: #{tpu_custom_call.1} parent=5 // pred_fallthru
        _
      %p190 = scmp.le.s32.totalorder 1, %s15
      %p191 = scmp.lt.s32.totalorder %s15, 5
      %p192 = pnand %p190, %p191
      %p193 = pneg %p192
      // Predicated region
      $region25: #{tpu_custom_call.1} parent=5 // pred_check
        _
      $region26: #{tpu_custom_call.1} parent=5 // pred_check_branch
        %195 = sbr.rel (%p192) target = $region28
      $region27: #{tpu_custom_call.1} parent=5 // pred_region
        %s196 = ssub.s32 %s15, 1
        %s197 = sand.u32 %s48, 1
        %s198 = scalar_lea.sflag [#allocation4], %s197
        %s199 = sand.u32 %s48, 1
        %s200 = smul.addr %s199, 16
        %s201 = scalar_lea.vmem [#allocation3], %s200
        // Predicated region
        $region29: #{tpu_custom_call.1} parent=27 // pred_check
          %p202 = pneg %p61
        $region30: #{tpu_custom_call.1} parent=27 // pred_check_branch
          %204 = sbr.rel (%p202) target = $region32
        $region31: #{tpu_custom_call.1} parent=27 // pred_region
          %205 = dma.done %s198, 256
        $region32: #{tpu_custom_call.1} parent=27 // pred_fallthru
          _
        %s206 = sand.u32 %s82, 1
        %s207 = scalar_lea.sflag [#allocation7], %s206
        %s208 = sand.u32 %s82, 1
        %s209 = smul.addr %s208, 16
        %s210 = scalar_lea.vmem [#allocation6], %s209
        // Predicated region
        $region33: #{tpu_custom_call.1} parent=27 // pred_check
          %p211 = pneg %p95
        $region34: #{tpu_custom_call.1} parent=27 // pred_check_branch
          %213 = sbr.rel (%p211) target = $region36
        $region35: #{tpu_custom_call.1} parent=27 // pred_region
          %214 = dma.done %s207, 256
        $region36: #{tpu_custom_call.1} parent=27 // pred_fallthru
          _
        %s215 = sand.u32 %s48, 1
        %s216 = scalar_lea.sflag [#allocation4], %s215
        %s217 = sand.u32 %s48, 1
        %s218 = smul.addr %s217, 16
        %s219 = scalar_lea.vmem [#allocation3], %s218
        %p220 = pneg %p61
        %p221 = pneg %p58
        %s222 = sand.u32 %s82, 1
        %s223 = scalar_lea.sflag [#allocation7], %s222
        %s224 = sand.u32 %s82, 1
        %s225 = smul.addr %s224, 16
        %s226 = scalar_lea.vmem [#allocation6], %s225
        %p227 = pneg %p95
        %p228 = pneg %p92
        %p229 = pneg %p121
        %p230 = pneg %p118
        %s231 = smul.u32 %s24, 4
        %s232 = sadd.s32 %s231, %s25
        %p233 = scmp.lt.s32.totalorder %s232, 3
        %s234 = scalar_select %p233, %s232, 3
        %s235 = smul.u32 2, %s234
        %s236 = smul.u32 %s24, 4
        %s237 = sadd.s32 %s236, %s25
        %p238 = scmp.lt.s32.totalorder %s237, 3
        %s239 = scalar_select %p238, %s237, 3
        %s240 = smul.u32 2, %s239
        %p241 = scmp.eq.s32.totalorder %s25, 0
        // Predicated region
        $region37: #{tpu_custom_call.1} parent=27 // pred_check
          %p242 = pneg %p241
        $region38: #{tpu_custom_call.1} parent=27 // pred_check_branch
          %244 = sbr.rel (%p242) target = $region40
        $region39: #{tpu_custom_call.1} parent=27 // pred_region
          %vm245 = vcmask 0
          %246 = vst.msk [vmem:[#allocation2] sm:$0x1] %vm245, 0.0
        $region40: #{tpu_custom_call.1} parent=27 // pred_fallthru
          _
        %s247 = smul.u32 %s24, 4
        %s248 = sadd.s32 %s247, %s25
        %p249 = scmp.lt.s32.totalorder %s248, 4
        // Predicated region
        $region41: #{tpu_custom_call.1} parent=27 // pred_check
          %p250 = pneg %p249
        $region42: #{tpu_custom_call.1} parent=27 // pred_check_branch
          %252 = sbr.rel (%p250) target = $region44
        $region43: #{tpu_custom_call.1} parent=27 // pred_region
          %v253 = vld [vmem:[%s201] sm:$0xff]
          %v254 = vld [vmem:[%s201 + $0x8] sm:$0xff]
          %v255 = vmul.f32 %v253, 0.33333334
          %v256 = vmul.f32 %v254, 0.33333334
          %257 = vmax.xlane.f32.xlu0 %v255
          %v258 = vpop.xlane.xlu0 %257
          %259 = vmax.xlane.f32.xlu0 %v256
          %v260 = vpop.xlane.xlu0 %259
          %v261 = vsub.f32 %v255, %v258
          %v262 = vsub.f32 %v256, %v260
          %v263 = vmul.f32 %v261, 1.442695
          %v264 = vpow.pop %v263
          %v265 = vmul.f32 %v262, 1.442695
          %v266 = vpow.pop %v265
          %267 = vadd.xlane.f32.xlu0 %v264
          %v268 = vpop.xlane.xlu0 %267
          %269 = vadd.xlane.f32.xlu0 %v266
          %v270 = vpop.xlane.xlu0 %269
          %v271 = vlog2.pop %v268
          %v272 = vmul.f32 %v271, 0.6931472
          %v273 = vlog2.pop %v270
          %v274 = vmul.f32 %v273, 0.6931472
          %v275 = vsub.f32 %v261, %v272
          %v276 = vsub.f32 %v262, %v274
          %v277 = vld [vmem:[%s210] sm:$0xff]
          %v278 = vld [vmem:[%s210 + $0x8] sm:$0xff]
          %v279 = vmul.f32 %v277, 0.33333334
          %v280 = vmul.f32 %v278, 0.33333334
          %281 = vmax.xlane.f32.xlu0 %v279
          %v282 = vpop.xlane.xlu0 %281
          %283 = vmax.xlane.f32.xlu0 %v280
          %v284 = vpop.xlane.xlu0 %283
          %v285 = vsub.f32 %v279, %v282
          %v286 = vsub.f32 %v280, %v284
          %v287 = vmul.f32 %v285, 1.442695
          %v288 = vpow.pop %v287
          %v289 = vmul.f32 %v286, 1.442695
          %v290 = vpow.pop %v289
          %291 = vadd.xlane.f32.xlu0 %v288
          %v292 = vpop.xlane.xlu0 %291
          %293 = vadd.xlane.f32.xlu0 %v290
          %v294 = vpop.xlane.xlu0 %293
          %v295 = vrcp.pop %v292
          %v296 = vrcp.pop %v294
          %v297 = vmul.f32 %v288, %v295
          %v298 = vmul.f32 %v290, %v296
          %v299 = vadd.f32 %v297, 1e-07
          %v300 = vadd.f32 %v298, 1e-07
          %v301 = vlog2.pop %v299
          %v302 = vmul.f32 %v301, 0.6931472
          %v303 = vlog2.pop %v300
          %v304 = vmul.f32 %v303, 0.6931472
          %v305 = vsub.f32 %v302, %v275
          %v306 = vsub.f32 %v304, %v276
          %v307 = vmul.f32 %v299, %v305
          %v308 = vmul.f32 %v300, %v306
          %309 = vadd.xlane.f32.xlu0 %v307
          %v310 = vpop.xlane.xlu0 %309
          %311 = vadd.xlane.f32.xlu0 %v308
          %v312 = vpop.xlane.xlu0 %311
          %s313 = sadd.s32 %s248, 1
          %s314 = smul.u32 %s313, 16
          %p315 = scmp.gt.s32.totalorder %s314, 64
          // Predicated region
          $region45: #{tpu_custom_call.1} parent=43 // pred_check
            %p316 = pneg %p315
          $region46: #{tpu_custom_call.1} parent=43 // pred_check_branch
            %318 = sbr.rel (%p316) target = $region48
          $region47: #{tpu_custom_call.1} parent=43 // pred_region
            %s319 = smul.u32 %s248, 16
            %v320 = vlaneseq
            %v321 = vshrl.u32 %v320, 7
            %v322 = vadd.s32 %v321, 8
            %v323 = vstv %s319
            %v324 = vadd.s32 %v323, %v321
            %v325 = vadd.s32 %v323, %v322
            %vm326 = vcmp.lt.s32.totalorder %v324, 64
            %vm327 = vcmp.lt.s32.totalorder %v325, 64
            %v328 = vsel %vm326, %v310, 0.0
            %v329 = vsel %vm327, %v312, 0.0
            %v330 = vld [vmem:[#allocation2] sm:$0x1]
            %vm331 = vcmask 7168
            %v332 = vsel %vm331, %v328, 0.0
            %v333 = vsel %vm331, %v329, 0.0
            %v334 = vadd.f32 %v332, %v333
            %335 = vadd.xlane.f32.xlu0 %v334
            %v336 = vpop.xlane.xlu0 %335
            %v337 = vrot.slane %v336, 4
            %v338 = vadd.f32 %v336, %v337
            %v339 = vrot.slane %v338, 2
            %v340 = vadd.f32 %v338, %v339
            %v341 = vrot.slane %v340, 1
            %v342 = vadd.f32 %v340, %v341
            %s343 = vtos %v342
            %v344 = vstv %s343
            %v345 = vadd.f32 %v330, %v344
            %vm346 = vcmask 0
            %347 = vst.msk [vmem:[#allocation2] sm:$0x1] %vm346, %v345
          $region48: #{tpu_custom_call.1} parent=43 // pred_fallthru
            _
          %p348 = scmp.le.s32.totalorder %s314, 64
          // Predicated region
          $region49: #{tpu_custom_call.1} parent=43 // pred_check
            %p349 = pneg %p348
          $region50: #{tpu_custom_call.1} parent=43 // pred_check_branch
            %351 = sbr.rel (%p349) target = $region52
          $region51: #{tpu_custom_call.1} parent=43 // pred_region
            %v352 = vld [vmem:[#allocation2] sm:$0x1]
            %vm353 = vcmask 7168
            %v354 = vsel %vm353, %v310, 0.0
            %v355 = vsel %vm353, %v312, 0.0
            %v356 = vadd.f32 %v354, %v355
            %357 = vadd.xlane.f32.xlu0 %v356
            %v358 = vpop.xlane.xlu0 %357
            %v359 = vrot.slane %v358, 4
            %v360 = vadd.f32 %v358, %v359
            %v361 = vrot.slane %v360, 2
            %v362 = vadd.f32 %v360, %v361
            %v363 = vrot.slane %v362, 1
            %v364 = vadd.f32 %v362, %v363
            %s365 = vtos %v364
            %v366 = vstv %s365
            %v367 = vadd.f32 %v352, %v366
            %vm368 = vcmask 0
            %369 = vst.msk [vmem:[#allocation2] sm:$0x1] %vm368, %v367
          $region52: #{tpu_custom_call.1} parent=43 // pred_fallthru
            _
        $region44: #{tpu_custom_call.1} parent=27 // pred_fallthru
          _
        %p370 = scmp.eq.s32.totalorder %s25, 3
        // Predicated region
        $region53: #{tpu_custom_call.1} parent=27 // pred_check
          %p371 = pneg %p370
        $region54: #{tpu_custom_call.1} parent=27 // pred_check_branch
          %373 = sbr.rel (%p371) target = $region56
        $region55: #{tpu_custom_call.1} parent=27 // pred_region
          %v374 = vld [vmem:[#allocation2] sm:$0x1]
          %v375 = vmul.f32 %v374, 0.140625
          %vm376 = vcmask 0
          %377 = vst.msk [vmem:[#allocation8] sm:$0x1] %vm376, %v375
        $region56: #{tpu_custom_call.1} parent=27 // pred_fallthru
          _
        // Predicated region
        $region57: #{tpu_custom_call.1} parent=27 // pred_check
          %p378 = pneg %p118
        $region58: #{tpu_custom_call.1} parent=27 // pred_check_branch
          %380 = sbr.rel (%p378) target = $region60
        $region59: #{tpu_custom_call.1} parent=27 // pred_region
          %s382 = ssub.s32 16, 16
          %383 = vsyncadd [#allocation5], %s382
          %s384 = smul.addr %s24, 16
          %s385 = scalar_lea.hbm %s2, %s384
          %s387 = sshll.u32 [#allocation8], 4
          %s388 = int_to_ptr.vmem [resolvable:$true] %s387
          %390 = dma.vmem_to_hbm [thread:$0]  %s388, 16, %s385, [#allocation5]
        $region60: #{tpu_custom_call.1} parent=27 // pred_fallthru
          _
        // Predicated region
        $region61: #{tpu_custom_call.1} parent=27 // pred_check
          %p391 = pneg %p118
        $region62: #{tpu_custom_call.1} parent=27 // pred_check_branch
          %393 = sbr.rel (%p391) target = $region64
        $region63: #{tpu_custom_call.1} parent=27 // pred_region
          %394 = dma.done [#allocation5], 16
        $region64: #{tpu_custom_call.1} parent=27 // pred_fallthru
          _
      $region28: #{tpu_custom_call.1} parent=5 // pred_fallthru
        _
      %p395 = scmp.le.s32.totalorder 2, %s15
      // Predicated region
      $region65: #{tpu_custom_call.1} parent=5 // pred_check
        %p396 = pneg %p395
      $region66: #{tpu_custom_call.1} parent=5 // pred_check_branch
        %398 = sbr.rel (%p396) target = $region68
      $region67: #{tpu_custom_call.1} parent=5 // pred_region
        %s399 = ssub.s32 %s15, 2
      $region68: #{tpu_custom_call.1} parent=5 // pred_fallthru
        _
    $region6: #{tpu_custom_call.1} parent=1 // loop_footer
      %s19 = sadd.s32 1, %s15
    $region7: #{tpu_custom_call.1} parent=1 // loop_footer_branch
      %14 = sbr.rel target = $region3
    $region8: #{tpu_custom_call.1} parent=1 // loop_exit
      _
    %400 = vsyncpa [#allocation4], 1
    %s401 = scalar_lea.sflag [#allocation4], 1
    %402 = vsyncpa %s401, 1
    %403 = vsyncpa [#allocation7], 1
    %s404 = scalar_lea.sflag [#allocation7], 1
    %405 = vsyncpa %s404, 1
    %406 = vsyncpa [#allocation5], 1
    %s407 = scalar_lea.sflag [#allocation5], 1
    %408 = vsyncpa %s407, 1

</llo_original>
